<compile_context>
chip_gen: v6e
topology: v6e:2x2x1
jax: 0.10.0
libtpu: 0.0.40
codegen_flags: <defaults>
</compile_context>

<pallas_src>
import jax
import jax.numpy as jnp
from jax.experimental import pallas as pl
from jax.experimental.pallas import tpu as pltpu

MXU_DTYPE = jnp.bfloat16   # matmul operand / activation-stream dtype; accumulation stays f32


# --------------------------------------------------------------------------
# Small helpers
# --------------------------------------------------------------------------
def _round_up(x, m):
    return (x + m - 1) // m * m


def _vmem_limit(need_bytes):
    # Explicit scoped-VMEM limit: actual need + headroom, clamped to a range
    # that is valid on v5e (16 MiB default) through v7x (64 MiB physical/TC).
    return int(min(max(need_bytes + (4 << 20), 16 << 20), 64 << 20))


def _pick_tile(dim, cap):
    """Largest multiple of 128 <= cap that divides round_up(dim, 128)."""
    dp = _round_up(dim, 128)
    best = 128
    t = 128
    while t <= min(cap, dp):
        if dp % t == 0:
            best = t
        t += 128
    return best


def _pick_time_block(s, target=32):
    # Largest divisor of S that is <= target.
    # TODO(synk): for awkward S (prime / odd) pad the time axis of xw/hseq to a
    # multiple of `target` and mask the tail instead of degrading to tiny TB.
    best = 1
    for cand in range(1, min(s, target) + 1):
        if s % cand == 0:
            best = cand
    return best


def _tensorcores_per_chip():
    # v7x-class chips have 2 TensorCores per chip; v5e/v6e have 1.
    try:
        kind = jax.devices()[0].device_kind.lower()
    except Exception:
        return 1
    return 2 if ("v7" in kind or "tpu7" in kind) else 1


def _pick_batch_block(b, n_cores):
    # Single batch tile on 1-TC chips (splitting only serializes and shrinks the
    # already-small MXU M); exactly 2 tiles (one per core) on v7x when B allows.
    if n_cores >= 2 and b % 16 == 0:
        return b // 2
    return b


# --------------------------------------------------------------------------
# Tiled matmul (+ optional bias):  y = x @ w_t + b   (w_t is pre-transposed)
# Used for the hoisted LSTM input projection and for the decoder.
# --------------------------------------------------------------------------
def _matmul_bias_1k_kernel(x_ref, w_ref, b_ref, o_ref):
    # Single K tile: no accumulator scratch, no init/finalize phases.
    o_ref[...] = (jnp.dot(x_ref[...], w_ref[...],
                          preferred_element_type=jnp.float32)
                  + b_ref[...]).astype(o_ref.dtype)


def _matmul_bias_acc_kernel(x_ref, w_ref, b_ref, o_ref, acc_ref):
    k = pl.program_id(2)

    @pl.when(k == 0)
    def _():
        acc_ref[...] = jnp.zeros_like(acc_ref)

    acc_ref[...] += jnp.dot(x_ref[...], w_ref[...],
                            preferred_element_type=jnp.float32)

    @pl.when(k == pl.num_programs(2) - 1)
    def _():
        o_ref[...] = (acc_ref[...] + b_ref[...]).astype(o_ref.dtype)


def matmul_bias(x, w_t, bias_row=None, *, tm=None, tn_cap=512, tk_cap=256,
                out_dtype=jnp.float32, n_valid=None):
    """x: (M, K); w_t: (K, N) pre-transposed (ideally already bf16 + lane-aligned);
    bias_row: (1, N) f32 or None.  Returns (M, n_valid or N)."""
    M, K = x.shape
    Kw, N = w_t.shape
    assert K == Kw, "x feature dim must match the (pre-transposed) weight K"

    tn = _pick_tile(N, tn_cap)
    tk = _pick_tile(K, tk_cap)
    Kp = _round_up(K, tk)
    Np = _round_up(N, tn)
    Mp = _round_up(M, 8)
    if tm is None:
        # Stream the weight from HBM exactly once when M fits a single tile.
        tm = Mp if Mp <= 1024 else 512
    tm = min(tm, Mp)
    Mp = _round_up(Mp, tm)

    # No-op for lane-aligned shapes (the common case after init-time prep).
    xb = x if x.dtype == MXU_DTYPE else x.astype(MXU_DTYPE)
    if (Mp, Kp) != (M, K):
        xb = jnp.zeros((Mp, Kp), MXU_DTYPE).at[:M, :K].set(xb)
    wb = w_t if w_t.dtype == MXU_DTYPE else w_t.astype(MXU_DTYPE)
    if (Kp, Np) != (Kw, N):
        wb = jnp.zeros((Kp, Np), MXU_DTYPE).at[:Kw, :N].set(wb)
    if bias_row is not None and bias_row.shape == (1, Np) and bias_row.dtype == jnp.float32:
        bb = bias_row
    else:
        bb = jnp.zeros((1, Np), jnp.float32)
        if bias_row is not None:
            flat = bias_row.reshape(-1).astype(jnp.float32)
            bb = bb.at[0, :flat.shape[0]].set(flat)

    nm, nn, nk = Mp // tm, Np // tn, Kp // tk
    out_bytes = jnp.dtype(out_dtype).itemsize
    need = (2 * tm * tk * 2 + 2 * tk * tn * 2 + 2 * tn * 4
            + 2 * tm * tn * out_bytes + (tm * tn * 4 if nk > 1 else 0))

    if nk == 1:
        out = pl.pallas_call(
            _matmul_bias_1k_kernel,
            out_shape=jax.ShapeDtypeStruct((Mp, Np), out_dtype),
            grid_spec=pltpu.PrefetchScalarGridSpec(
                num_scalar_prefetch=0,
                grid=(nm, nn),
                in_specs=[
                    pl.BlockSpec((tm, tk), lambda i, j: (i, 0)),
                    pl.BlockSpec((tk, tn), lambda i, j: (0, j)),
                    pl.BlockSpec((1, tn), lambda i, j: (0, j)),
                ],
                out_specs=pl.BlockSpec((tm, tn), lambda i, j: (i, j)),
            ),
            compiler_params=pltpu.CompilerParams(
                dimension_semantics=("parallel", "parallel"),
                vmem_limit_bytes=_vmem_limit(need)),
        )(xb, wb, bb)
    else:
        out = pl.pallas_call(
            _matmul_bias_acc_kernel,
            out_shape=jax.ShapeDtypeStruct((Mp, Np), out_dtype),
            grid_spec=pltpu.PrefetchScalarGridSpec(
                num_scalar_prefetch=0,
                grid=(nm, nn, nk),
                in_specs=[
                    pl.BlockSpec((tm, tk), lambda i, j, k: (i, k)),
                    pl.BlockSpec((tk, tn), lambda i, j, k: (k, j)),
                    pl.BlockSpec((1, tn), lambda i, j, k: (0, j)),
                ],
                out_specs=pl.BlockSpec((tm, tn), lambda i, j, k: (i, j)),
                scratch_shapes=[pltpu.VMEM((tm, tn), jnp.float32)],
            ),
            compiler_params=pltpu.CompilerParams(
                dimension_semantics=("parallel", "parallel", "arbitrary"),
                vmem_limit_bytes=_vmem_limit(need)),
        )(xb, wb, bb)

    n_out = N if n_valid is None else n_valid
    if (Mp, Np) != (M, n_out):          # skipped entirely when shapes are aligned
        out = out[:M, :n_out]
    return out


# --------------------------------------------------------------------------
# LSTM recurrence kernel.  PyTorch gate order [i, f, g, o], bias=False.
# Input projection (x @ W_ih^T) is precomputed; per step only h @ W_hh^T.
# Grid: (batch_tiles [parallel], time_blocks [arbitrary]); h/c in VMEM scratch.
# --------------------------------------------------------------------------
def _lstm_rec_kernel(xw_ref, h0_ref, c0_ref, whh_ref,
                     hseq_ref, hfin_ref, cfin_ref,
                     h_sc, c_sc):
    tb = pl.program_id(1)

    @pl.when(tb == 0)
    def _():
        h_sc[...] = h0_ref[...]
        c_sc[...] = c0_ref[...]

    TB = hseq_ref.shape[0]
    H = h_sc.shape[1]
    w_hh = whh_ref[...]               # (H, 4H) bf16, resident across the time block

    # nhid should be a multiple of 128 so gate slices / hseq stores stay
    # lane-dense (no masked vst, no cross-lane relayout).
    def step(i, carry):
        h_prev = h_sc[...]
        c_prev = c_sc[...]
        gates = xw_ref[i].astype(jnp.float32) + jnp.dot(
            h_prev.astype(w_hh.dtype), w_hh, preferred_element_type=jnp.float32)
        i_g = jax.nn.sigmoid(gates[:, 0 * H:1 * H])
        f_g = jax.nn.sigmoid(gates[:, 1 * H:2 * H])
        g_g = jnp.tanh(gates[:, 2 * H:3 * H])
        o_g = jax.nn.sigmoid(gates[:, 3 * H:4 * H])
        c_new = f_g * c_prev + i_g * g_g
        h_new = o_g * jnp.tanh(c_new)
        c_sc[...] = c_new
        h_sc[...] = h_new
        hseq_ref[i] = h_new.astype(hseq_ref.dtype)   # bf16 activation stream
        return carry

    # Partial unroll bounds vreg pressure (full 16x unroll risks spills on the
    # already-busy vld/vst slots).
    jax.lax.fori_loop(0, TB, step, 0, unroll=min(4, TB))

    @pl.when(tb == pl.num_programs(1) - 1)
    def _():
        hfin_ref[...] = h_sc[...]
        cfin_ref[...] = c_sc[...]


def lstm_layer(x, h0, c0, w_ih_t, w_hh_t, *, n_cores=1):
    """x: (S, B, I) bf16/f32; h0/c0: (B, H) f32; w_ih_t: (I, 4H) bf16; w_hh_t: (H, 4H) bf16."""
    S, B, I = x.shape
    H = h0.shape[1]

    # (a) Hoisted input projection: one large lane-dense MXU matmul, bf16 output
    #     (it is only ever added to an f32 accumulation inside the recurrence).
    xw = matmul_bias(x.reshape(S * B, I), w_ih_t,
                     out_dtype=MXU_DTYPE).reshape(S, B, 4 * H)

    TB = _pick_time_block(S)
    BB = _pick_batch_block(B, n_cores)

    need = (2 * TB * BB * 4 * H * 2      # xw blocks (bf16, double-buffered)
            + 2 * TB * BB * H * 2        # hseq blocks (bf16, double-buffered)
            + 2 * H * 4 * H * 2          # W_hh (bf16)  TODO(synk): single-buffer (constant block) on v7x
            + 4 * 2 * BB * H * 4         # h0, c0, hfin, cfin (f32, double-buffered)
            + 2 * BB * H * 4)            # h/c carry scratch (f32)

    return pl.pallas_call(
        _lstm_rec_kernel,
        out_shape=(jax.ShapeDtypeStruct((S, B, H), MXU_DTYPE),     # h sequence (bf16 stream)
                   jax.ShapeDtypeStruct((B, H), jnp.float32),      # final h
                   jax.ShapeDtypeStruct((B, H), jnp.float32)),     # final c
        grid_spec=pltpu.PrefetchScalarGridSpec(
            num_scalar_prefetch=0,
            grid=(B // BB, S // TB),
            in_specs=[
                pl.BlockSpec((TB, BB, 4 * H), lambda b, t: (t, b, 0)),  # x @ W_ih^T
                pl.BlockSpec((BB, H), lambda b, t: (b, 0)),             # h0
                pl.BlockSpec((BB, H), lambda b, t: (b, 0)),             # c0
                pl.BlockSpec((H, 4 * H), lambda b, t: (0, 0)),          # W_hh^T (resident)
            ],
            out_specs=(
                pl.BlockSpec((TB, BB, H), lambda b, t: (t, b, 0)),
                pl.BlockSpec((BB, H), lambda b, t: (b, 0)),
                pl.BlockSpec((BB, H), lambda b, t: (b, 0)),
            ),
            scratch_shapes=[pltpu.VMEM((BB, H), jnp.float32),           # h carry
                            pltpu.VMEM((BB, H), jnp.float32)],          # c carry
        ),
        compiler_params=pltpu.CompilerParams(
            dimension_semantics=("parallel", "arbitrary"),
            vmem_limit_bytes=_vmem_limit(need)),
    )(xw, h0, c0, w_hh_t)


# --------------------------------------------------------------------------
# Full RNNModel forward (LSTM variant)
# --------------------------------------------------------------------------
def rnn_model_forward(tokens, hidden, params, *, ntokens=None):
    """tokens: (S, B) int32; hidden: (h, c), each (nlayers, B, nhid) f32."""
    h_in, c_in = hidden
    # Embedding lookup: gather stays in plain JAX glue (bf16 table feeds bf16 matmul).
    x = jnp.take(params["encoder_w"], tokens, axis=0)        # (S, B, ninp)

    n_cores = _tensorcores_per_chip()
    h_out, c_out = [], []
    for layer in range(len(params["w_ih_t"])):
        x, h_f, c_f = lstm_layer(x, h_in[layer], c_in[layer],
                                 params["w_ih_t"][layer], params["w_hh_t"][layer],
                                 n_cores=n_cores)
        h_out.append(h_f)
        c_out.append(c_f)
    # TODO(synk): layers could be fused into one pallas_call (wavefront over
    # (layer, time_block)) to avoid the HBM round-trip of activations per layer.

    S, B, H = x.shape
    out2d = x.reshape(S * B, H)                               # output.view(-1, nhid)
    decoded = matmul_bias(out2d, params["decoder_w_t"], params["decoder_b"],
                          tm=None, n_valid=ntokens)           # full-M tile: weight streamed once
    return decoded, (jnp.stack(h_out, 0), jnp.stack(c_out, 0))


def init_params(key, ntokens, ninp, nhid, nlayers):
    """Weights stored pre-transposed, pre-cast to bf16, decoder pre-padded to a
    lane-aligned vocab — all one-time init work hoisted off the forward path."""
    keys = jax.random.split(key, 2 + 2 * nlayers)
    initrange = 0.1
    stdv = 1.0 / float(nhid) ** 0.5
    ntokens_p = _round_up(ntokens, 128)

    enc = jax.random.uniform(keys[0], (ntokens, ninp), jnp.float32,
                             -initrange, initrange)
    dec = jax.random.uniform(keys[1], (nhid, ntokens), jnp.float32,
                             -initrange, initrange)
    dec_p = jnp.zeros((nhid, ntokens_p), MXU_DTYPE).at[:, :ntokens].set(
        dec.astype(MXU_DTYPE))

    params = {
        # init_weights(): encoder/decoder uniform(-0.1, 0.1), decoder bias zero.
        "encoder_w": enc.astype(MXU_DTYPE),
        "decoder_w_t": dec_p,                                  # (nhid, ntokens_p) bf16
        "decoder_b": jnp.zeros((1, ntokens_p), jnp.float32),   # (1, ntokens_p) f32
        # LSTM weights pre-transposed: W_ih^T (in, 4H), W_hh^T (H, 4H), bf16.
        "w_ih_t": [],
        "w_hh_t": [],
    }
    for layer in range(nlayers):
        in_dim = ninp if layer == 0 else nhid
        w_ih = jax.random.uniform(keys[2 + 2 * layer], (in_dim, 4 * nhid),
                                  jnp.float32, -stdv, stdv)
        w_hh = jax.random.uniform(keys[3 + 2 * layer], (nhid, 4 * nhid),
                                  jnp.float32, -stdv, stdv)
        params["w_ih_t"].append(w_ih.astype(MXU_DTYPE))
        params["w_hh_t"].append(w_hh.astype(MXU_DTYPE))
    return params


if __name__ == "__main__":
    # Small, lane-aligned shapes (nhid/ninp multiples of 128, ntokens multiple
    # of 128, S*B multiple of 8) so the hot path has no padding/slice copies.
    ntokens, ninp, nhid, nlayers = 256, 128, 128, 2
    seq_len, batch = 16, 8

    key = jax.random.PRNGKey(0)
    k_tok, k_par = jax.random.split(key)

    params = init_params(k_par, ntokens, ninp, nhid, nlayers)
    tokens = jax.random.randint(k_tok, (seq_len, batch), 0, ntokens, jnp.int32)

    # init_hidden(bsz): zeros for (h, c)
    h0 = jnp.zeros((nlayers, batch, nhid), jnp.float32)
    c0 = jnp.zeros((nlayers, batch, nhid), jnp.float32)

    decoded, (h_n, c_n) = rnn_model_forward(tokens, (h0, c0), params,
                                            ntokens=ntokens)
    jax.block_until_ready((decoded, h_n, c_n))

    assert decoded.shape == (seq_len * batch, ntokens)
    assert h_n.shape == (nlayers, batch, nhid)
    assert c_n.shape == (nlayers, batch, nhid)
    print("KERNEL_OK")
</pallas_src>

<mosaic_0001>
module attributes {stable_mosaic.version = 11 : i64} {
  func.func @_matmul_bias_1k_kernel(%arg0: i32, %arg1: i32, %arg2: memref<128x128xbf16, #tpu.memory_space<vmem>>, %arg3: memref<128x512xbf16, #tpu.memory_space<vmem>>, %arg4: memref<1x512xf32, #tpu.memory_space<vmem>>, %arg5: memref<128x512xbf16, #tpu.memory_space<vmem>>) attributes {dimension_semantics = [#tpu.dimension_semantics<parallel>, #tpu.dimension_semantics<parallel>], iteration_bounds = array<i64: 1, 1>, scalar_prefetch = 0 : i64, scratch_operands = 0 : i64, tpu.core_type = #tpu.core_type<tc>, window_params = [{transform_indices = @transform_0, window_bounds = array<i64: 128, 128>}, {transform_indices = @transform_1, window_bounds = array<i64: 128, 512>}, {transform_indices = @transform_2, window_bounds = array<i64: 1, 512>}, {transform_indices = @transform_3, window_bounds = array<i64: 128, 512>}]} {
    %c0 = arith.constant 0 : index
    %c0_0 = arith.constant 0 : index
    %0 = vector.load %arg2[%c0, %c0_0] : memref<128x128xbf16, #tpu.memory_space<vmem>>, vector<128x128xbf16>
    %c0_1 = arith.constant 0 : index
    %c0_2 = arith.constant 0 : index
    %1 = vector.load %arg3[%c0_1, %c0_2] : memref<128x512xbf16, #tpu.memory_space<vmem>>, vector<128x512xbf16>
    %cst = arith.constant dense<0.000000e+00> : vector<128x512xf32>
    %2 = tpu.matmul %0, %1, %cst {dimension_numbers = #tpu.dot_dimension_numbers<[1], [0], [0], [1], [0, 0, 1, 1], [], []>} : vector<128x128xbf16>, vector<128x512xbf16>, vector<128x512xf32> -> vector<128x512xf32>
    %c0_3 = arith.constant 0 : index
    %c0_4 = arith.constant 0 : index
    %3 = vector.load %arg4[%c0_3, %c0_4] : memref<1x512xf32, #tpu.memory_space<vmem>>, vector<1x512xf32>
    %4 = vector.broadcast %3 : vector<1x512xf32> to vector<128x512xf32>
    %5 = arith.addf %2, %4 : vector<128x512xf32>
    %6 = arith.truncf %5 : vector<128x512xf32> to vector<128x512xbf16>
    %c0_5 = arith.constant 0 : index
    %c0_6 = arith.constant 0 : index
    %7 = vector.load %arg5[%c0_5, %c0_6] : memref<128x512xbf16, #tpu.memory_space<vmem>>, vector<128x512xbf16>
    tpu.vector_store %arg5[%c0_5, %c0_6], %6 {strides = array<i32>} : memref<128x512xbf16, #tpu.memory_space<vmem>>, vector<128x512xbf16>,
    return
  }
  func.func @transform_0(%arg0: i32, %arg1: i32) -> (i32, i32) {
    %c0_i32 = arith.constant 0 : i32
    %c0_i32_0 = arith.constant 0 : i32
    return %arg0, %c0_i32 : i32, i32
  }
  func.func @transform_1(%arg0: i32, %arg1: i32) -> (i32, i32) {
    %c0_i32 = arith.constant 0 : i32
    %c0_i32_0 = arith.constant 0 : i32
    return %c0_i32, %arg1 : i32, i32
  }
  func.func @transform_2(%arg0: i32, %arg1: i32) -> (i32, i32) {
    %c0_i32 = arith.constant 0 : i32
    %c0_i32_0 = arith.constant 0 : i32
    return %c0_i32, %arg1 : i32, i32
  }
  func.func @transform_3(%arg0: i32, %arg1: i32) -> (i32, i32) {
    %c0_i32 = arith.constant 0 : i32
    return %arg0, %arg1 : i32, i32
  }
}

</mosaic_0001>

<llo_original>
// kernel: tpu_custom_call.1
$region0: #{tpu_custom_call.1}
  #allocation0 [shape = 'u32[]', space=smem, size = 0x4, offset = 0x4, fixed_abs, tag = 'smem constant byte address 0x4 - core index']
  #allocation1 [shape = 'u32[144,128]{1,0:T(1,128)}', space=vmem, size = 0x12000, scoped, tag = 'internal scratch']
  %s0 = inlined_call_operand.hbm [shape: bf16[128,128], index: 0, kind: input, shape index: {}]
  %s1 = inlined_call_operand.hbm [shape: bf16[128,512], index: 1, kind: input, shape index: {}]
  %s2 = inlined_call_operand.hbm [shape: f32[1,512], index: 2, kind: input, shape index: {}]
  %s3 = inlined_call_operand.hbm [shape: bf16[128,512], index: 3, kind: output, shape index: {}]
  %s4 = sld [smem:[#allocation0]]
  $region34: #{tpu_custom_call.1} parent=0
    _
  %s6 = ssub.s32 1, %s4
  %s7 = scalar_select 0, %s6, %s4
  $region1: #{tpu_custom_call.1} parent=0
    #allocation2 [shape = 'u8[32768]{0}', space=vmem, size = 0x8000, scoped, tag = 'input window, operand 0, single buffered']
    #allocation3 [shape = 's32[1]{0}', space=sflag, size = 0x4, scoped, tag = 'scoped memory for tpu_custom_call.1']
    #allocation4 [shape = 's32[1]{0}', space=sflag, size = 0x4, scoped, tag = 'scoped memory for tpu_custom_call.1']
    #allocation5 [shape = 'u8[131072]{0}', space=vmem, size = 0x20000, scoped, tag = 'input window, operand 1, single buffered']
    #allocation6 [shape = 's32[1]{0}', space=sflag, size = 0x4, scoped, tag = 'scoped memory for tpu_custom_call.1']
    #allocation7 [shape = 'u8[2048]{0}', space=vmem, size = 0x800, scoped, tag = 'input window, operand 2, single buffered']
    #allocation8 [shape = 'u8[131072]{0}', space=vmem, size = 0x20000, scoped, tag = 'output window, operand 0, single buffered']
    %8 = vsyncpa [#allocation3], 0
    %9 = vsyncpa [#allocation6], 0
    %10 = vsyncpa [#allocation4], 0
    // Predicated region
    $region2: #{tpu_custom_call.1} parent=1 // pred_check
      _
    $region3: #{tpu_custom_call.1} parent=1 // pred_check_branch
      %12 = sbr.rel (0) target = $region5
    $region4: #{tpu_custom_call.1} parent=1 // pred_region
      %s14 = ssub.s32 1024, 1024
      %15 = vsyncadd [#allocation3], %s14
      %s16 = sshll.u32 [#allocation2], 4
      %s17 = int_to_ptr.vmem [resolvable:$true] %s16
      %22 = dma.hbm_to_vmem [thread:$0]  %s0, 1024, %s17, [#allocation3], 64, 64, 4
    $region5: #{tpu_custom_call.1} parent=1 // pred_fallthru
      _
    // Predicated region
    $region6: #{tpu_custom_call.1} parent=1 // pred_check
      _
    $region7: #{tpu_custom_call.1} parent=1 // pred_check_branch
      %24 = sbr.rel (0) target = $region9
    $region8: #{tpu_custom_call.1} parent=1 // pred_region
      %s26 = ssub.s32 4096, 4096
      %27 = vsyncadd [#allocation6], %s26
      %s28 = sshll.u32 [#allocation5], 4
      %s29 = int_to_ptr.vmem [resolvable:$true] %s28
      %34 = dma.hbm_to_vmem [thread:$0]  %s1, 4096, %s29, [#allocation6], 256, 256, 16
    $region9: #{tpu_custom_call.1} parent=1 // pred_fallthru
      _
    // Predicated region
    $region10: #{tpu_custom_call.1} parent=1 // pred_check
      _
    $region11: #{tpu_custom_call.1} parent=1 // pred_check_branch
      %36 = sbr.rel (0) target = $region13
    $region12: #{tpu_custom_call.1} parent=1 // pred_region
      %s38 = ssub.s32 64, 64
      %39 = vsyncadd [#allocation6], %s38
      %s41 = sshll.u32 [#allocation7], 4
      %s42 = int_to_ptr.vmem [resolvable:$true] %s41
      %44 = dma.hbm_to_vmem [thread:$0]  %s2, 64, %s42, [#allocation6]
    $region13: #{tpu_custom_call.1} parent=1 // pred_fallthru
      _
    // Predicated region
    $region14: #{tpu_custom_call.1} parent=1 // pred_check
      _
    $region15: #{tpu_custom_call.1} parent=1 // pred_check_branch
      %46 = sbr.rel (0) target = $region17
    $region16: #{tpu_custom_call.1} parent=1 // pred_region
      %47 = dma.done [#allocation3], 1024
    $region17: #{tpu_custom_call.1} parent=1 // pred_fallthru
      _
    // Predicated region
    $region18: #{tpu_custom_call.1} parent=1 // pred_check
      _
    $region19: #{tpu_custom_call.1} parent=1 // pred_check_branch
      %49 = sbr.rel (0) target = $region21
    $region20: #{tpu_custom_call.1} parent=1 // pred_region
      %50 = dma.done [#allocation6], 4096
    $region21: #{tpu_custom_call.1} parent=1 // pred_fallthru
      _
    // Predicated region
    $region22: #{tpu_custom_call.1} parent=1 // pred_check
      _
    $region23: #{tpu_custom_call.1} parent=1 // pred_check_branch
      %52 = sbr.rel (0) target = $region25
    $region24: #{tpu_custom_call.1} parent=1 // pred_region
      %53 = dma.done [#allocation6], 64
    $region25: #{tpu_custom_call.1} parent=1 // pred_fallthru
      _
    %v55 = vld [vmem:[#allocation2] sm:$0xf]
    %v56 = vld [vmem:[#allocation2 + $0x4] sm:$0xf]
    %v57 = vld [vmem:[#allocation2 + $0x8] sm:$0xf]
    %v58 = vld [vmem:[#allocation2 + $0xc] sm:$0xf]
    %v59 = vld [vmem:[#allocation2 + $0x10] sm:$0xf]
    %v60 = vld [vmem:[#allocation2 + $0x14] sm:$0xf]
    %v61 = vld [vmem:[#allocation2 + $0x18] sm:$0xf]
    %v62 = vld [vmem:[#allocation2 + $0x1c] sm:$0xf]
    %v63 = vld [vmem:[#allocation2 + $0x20] sm:$0xf]
    %v64 = vld [vmem:[#allocation2 + $0x24] sm:$0xf]
    %v65 = vld [vmem:[#allocation2 + $0x28] sm:$0xf]
    %v66 = vld [vmem:[#allocation2 + $0x2c] sm:$0xf]
    %v67 = vld [vmem:[#allocation2 + $0x30] sm:$0xf]
    %v68 = vld [vmem:[#allocation2 + $0x34] sm:$0xf]
    %v69 = vld [vmem:[#allocation2 + $0x38] sm:$0xf]
    %v70 = vld [vmem:[#allocation2 + $0x3c] sm:$0xf]
    %v71 = vld [vmem:[#allocation5] sm:$0xff]
    %v72 = vld [vmem:[#allocation5 + $0x8] sm:$0xff]
    %v73 = vld [vmem:[#allocation5 + $0x10] sm:$0xff]
    %v74 = vld [vmem:[#allocation5 + $0x18] sm:$0xff]
    %v75 = vld [vmem:[#allocation5 + $0x20] sm:$0xff]
    %v76 = vld [vmem:[#allocation5 + $0x28] sm:$0xff]
    %v77 = vld [vmem:[#allocation5 + $0x30] sm:$0xff]
    %v78 = vld [vmem:[#allocation5 + $0x38] sm:$0xff]
    %v79 = vld [vmem:[#allocation5 + $0x40] sm:$0xff]
    %v80 = vld [vmem:[#allocation5 + $0x48] sm:$0xff]
    %v81 = vld [vmem:[#allocation5 + $0x50] sm:$0xff]
    %v82 = vld [vmem:[#allocation5 + $0x58] sm:$0xff]
    %v83 = vld [vmem:[#allocation5 + $0x60] sm:$0xff]
    %v84 = vld [vmem:[#allocation5 + $0x68] sm:$0xff]
    %v85 = vld [vmem:[#allocation5 + $0x70] sm:$0xff]
    %v86 = vld [vmem:[#allocation5 + $0x78] sm:$0xff]
    %v87 = vld [vmem:[#allocation5 + $0x80] sm:$0xff]
    %v88 = vld [vmem:[#allocation5 + $0x88] sm:$0xff]
    %v89 = vld [vmem:[#allocation5 + $0x90] sm:$0xff]
    %v90 = vld [vmem:[#allocation5 + $0x98] sm:$0xff]
    %v91 = vld [vmem:[#allocation5 + $0xa0] sm:$0xff]
    %v92 = vld [vmem:[#allocation5 + $0xa8] sm:$0xff]
    %v93 = vld [vmem:[#allocation5 + $0xb0] sm:$0xff]
    %v94 = vld [vmem:[#allocation5 + $0xb8] sm:$0xff]
    %v95 = vld [vmem:[#allocation5 + $0xc0] sm:$0xff]
    %v96 = vld [vmem:[#allocation5 + $0xc8] sm:$0xff]
    %v97 = vld [vmem:[#allocation5 + $0xd0] sm:$0xff]
    %v98 = vld [vmem:[#allocation5 + $0xd8] sm:$0xff]
    %v99 = vld [vmem:[#allocation5 + $0xe0] sm:$0xff]
    %v100 = vld [vmem:[#allocation5 + $0xe8] sm:$0xff]
    %v101 = vld [vmem:[#allocation5 + $0xf0] sm:$0xff]
    %v102 = vld [vmem:[#allocation5 + $0xf8] sm:$0xff]
    %v103 = vld [vmem:[#allocation7] sm:$0xf]
    %v105 = vlaneseq
    %v106 = vshrl.u32 %v105, 7
    %v107 = vsub.s32 0, %v106
    %v108 = vrot.slane %v103, %v107
    %v109 = vlaneseq
    %v110 = vshrl.u32 %v109, 7
    %v111 = vsub.s32 1, %v110
    %v112 = vrot.slane %v103, %v111
    %v113 = vlaneseq
    %v114 = vshrl.u32 %v113, 7
    %v115 = vsub.s32 2, %v114
    %v116 = vrot.slane %v103, %v115
    %v117 = vlaneseq
    %v118 = vshrl.u32 %v117, 7
    %v119 = vsub.s32 3, %v118
    %v120 = vrot.slane %v103, %v119
    %v141 = vunpack.c.l.b16 %v55
    %v142 = vunpack.c.l.b16 %v56
    %v143 = vunpack.c.l.b16 %v57
    %v144 = vunpack.c.l.b16 %v58
    %v145 = vunpack.c.l.b16 %v59
    %v146 = vunpack.c.l.b16 %v60
    %v147 = vunpack.c.l.b16 %v61
    %v148 = vunpack.c.l.b16 %v62
    %v149 = vunpack.c.l.b16 %v63
    %v150 = vunpack.c.l.b16 %v64
    %v151 = vunpack.c.l.b16 %v65
    %v152 = vunpack.c.l.b16 %v66
    %v153 = vunpack.c.l.b16 %v67
    %v154 = vunpack.c.l.b16 %v68
    %v155 = vunpack.c.l.b16 %v69
    %v156 = vunpack.c.l.b16 %v70
    %v157 = vpack.c.b16 %v142, %v141
    %v158 = vpack.c.b16 %v144, %v143
    %v159 = vpack.c.b16 %v146, %v145
    %v160 = vpack.c.b16 %v148, %v147
    %v161 = vpack.c.b16 %v150, %v149
    %v162 = vpack.c.b16 %v152, %v151
    %v163 = vpack.c.b16 %v154, %v153
    %v164 = vpack.c.b16 %v156, %v155
    %v205 = vunpack.c.l.b16 %v71
    %v206 = vunpack.c.h.b16 %v71
    %v207 = vunpack.c.l.b16 %v72
    %v208 = vunpack.c.h.b16 %v72
    %v209 = vunpack.c.l.b16 %v73
    %v210 = vunpack.c.h.b16 %v73
    %v211 = vunpack.c.l.b16 %v74
    %v212 = vunpack.c.h.b16 %v74
    %v213 = vunpack.c.l.b16 %v75
    %v214 = vunpack.c.h.b16 %v75
    %v215 = vunpack.c.l.b16 %v76
    %v216 = vunpack.c.h.b16 %v76
    %v217 = vunpack.c.l.b16 %v77
    %v218 = vunpack.c.h.b16 %v77
    %v219 = vunpack.c.l.b16 %v78
    %v220 = vunpack.c.h.b16 %v78
    %v221 = vunpack.c.l.b16 %v79
    %v222 = vunpack.c.h.b16 %v79
    %v223 = vunpack.c.l.b16 %v80
    %v224 = vunpack.c.h.b16 %v80
    %v225 = vunpack.c.l.b16 %v81
    %v226 = vunpack.c.h.b16 %v81
    %v227 = vunpack.c.l.b16 %v82
    %v228 = vunpack.c.h.b16 %v82
    %v229 = vunpack.c.l.b16 %v83
    %v230 = vunpack.c.h.b16 %v83
    %v231 = vunpack.c.l.b16 %v84
    %v232 = vunpack.c.h.b16 %v84
    %v233 = vunpack.c.l.b16 %v85
    %v234 = vunpack.c.h.b16 %v85
    %v235 = vunpack.c.l.b16 %v86
    %v236 = vunpack.c.h.b16 %v86
    %v237 = vunpack.c.l.b16 %v87
    %v238 = vunpack.c.h.b16 %v87
    %v239 = vunpack.c.l.b16 %v88
    %v240 = vunpack.c.h.b16 %v88
    %v241 = vunpack.c.l.b16 %v89
    %v242 = vunpack.c.h.b16 %v89
    %v243 = vunpack.c.l.b16 %v90
    %v244 = vunpack.c.h.b16 %v90
    %v245 = vunpack.c.l.b16 %v91
    %v246 = vunpack.c.h.b16 %v91
    %v247 = vunpack.c.l.b16 %v92
    %v248 = vunpack.c.h.b16 %v92
    %v249 = vunpack.c.l.b16 %v93
    %v250 = vunpack.c.h.b16 %v93
    %v251 = vunpack.c.l.b16 %v94
    %v252 = vunpack.c.h.b16 %v94
    %v253 = vunpack.c.l.b16 %v95
    %v254 = vunpack.c.h.b16 %v95
    %v255 = vunpack.c.l.b16 %v96
    %v256 = vunpack.c.h.b16 %v96
    %v257 = vunpack.c.l.b16 %v97
    %v258 = vunpack.c.h.b16 %v97
    %v259 = vunpack.c.l.b16 %v98
    %v260 = vunpack.c.h.b16 %v98
    %v261 = vunpack.c.l.b16 %v99
    %v262 = vunpack.c.h.b16 %v99
    %v263 = vunpack.c.l.b16 %v100
    %v264 = vunpack.c.h.b16 %v100
    %v265 = vunpack.c.l.b16 %v101
    %v266 = vunpack.c.h.b16 %v101
    %v267 = vunpack.c.l.b16 %v102
    %v268 = vunpack.c.h.b16 %v102
    %v269 = vpack.c.b16 %v209, %v205
    %v270 = vpack.c.b16 %v210, %v206
    %v271 = vpack.c.b16 %v211, %v207
    %v272 = vpack.c.b16 %v212, %v208
    %v273 = vpack.c.b16 %v217, %v213
    %v274 = vpack.c.b16 %v218, %v214
    %v275 = vpack.c.b16 %v219, %v215
    %v276 = vpack.c.b16 %v220, %v216
    %v277 = vpack.c.b16 %v225, %v221
    %v278 = vpack.c.b16 %v226, %v222
    %v279 = vpack.c.b16 %v227, %v223
    %v280 = vpack.c.b16 %v228, %v224
    %v281 = vpack.c.b16 %v233, %v229
    %v282 = vpack.c.b16 %v234, %v230
    %v283 = vpack.c.b16 %v235, %v231
    %v284 = vpack.c.b16 %v236, %v232
    %v285 = vpack.c.b16 %v241, %v237
    %v286 = vpack.c.b16 %v242, %v238
    %v287 = vpack.c.b16 %v243, %v239
    %v288 = vpack.c.b16 %v244, %v240
    %v289 = vpack.c.b16 %v249, %v245
    %v290 = vpack.c.b16 %v250, %v246
    %v291 = vpack.c.b16 %v251, %v247
    %v292 = vpack.c.b16 %v252, %v248
    %v293 = vpack.c.b16 %v257, %v253
    %v294 = vpack.c.b16 %v258, %v254
    %v295 = vpack.c.b16 %v259, %v255
    %v296 = vpack.c.b16 %v260, %v256
    %v297 = vpack.c.b16 %v265, %v261
    %v298 = vpack.c.b16 %v266, %v262
    %v299 = vpack.c.b16 %v267, %v263
    %v300 = vpack.c.b16 %v268, %v264
    %333 = vmatprep.subr.bf16.mxu0 %v298
    %334 = vmatpush1.bf16.msra.mxu0 %v297
    %335 = vmatprep.subr.bf16.mxu0 %v294
    %336 = vmatpush1.bf16.msra.mxu0 %v293
    %337 = vmatprep.subr.bf16.mxu0 %v290
    %338 = vmatpush1.bf16.msra.mxu0 %v289
    %339 = vmatprep.subr.bf16.mxu0 %v286
    %340 = vmatpush1.bf16.msra.mxu0 %v285
    %341 = vmatprep.subr.bf16.mxu0 %v282
    %342 = vmatpush1.bf16.msra.mxu0 %v281
    %343 = vmatprep.subr.bf16.mxu0 %v278
    %344 = vmatpush1.bf16.msra.mxu0 %v277
    %345 = vmatprep.subr.bf16.mxu0 %v274
    %346 = vmatpush1.bf16.msra.mxu0 %v273
    %347 = vmatprep.subr.bf16.mxu0 %v270
    %348 = vmatpush1.bf16.msra.mxu0 %v269
    %349 = vmatprep.subr.bf16.mxu0 0
    %350 = vmatpush2.bf16.msra.mxu0 0
    %351 = vmatprep.subr.bf16.mxu0 0
    %352 = vmatpush2.bf16.msra.mxu0 0
    %353 = vmatprep.subr.bf16.mxu0 0
    %354 = vmatpush2.bf16.msra.mxu0 0
    %355 = vmatprep.subr.bf16.mxu0 0
    %356 = vmatpush2.bf16.msra.mxu0 0
    %357 = vmatprep.subr.bf16.mxu0 0
    %358 = vmatpush2.bf16.msra.mxu0 0
    %359 = vmatprep.subr.bf16.mxu0 0
    %360 = vmatpush2.bf16.msra.mxu0 0
    %361 = vmatprep.subr.bf16.mxu0 0
    %362 = vmatpush2.bf16.msra.mxu0 0
    %363 = vmatprep.subr.bf16.mxu0 0
    %364 = vmatpush2.bf16.msra.mxu0 0
    %365 = vmatprep.mubr.bf16.mxu0 0
    %366 = vmatmul.mubr.bf16.gmra.mxu0 %v157
    %v367 = vpop.f32.mrf.mxu0
    %v368 = vadd.f32 %v108, %v367
    %v369 = vpop.f32.mrf.mxu0
    %v370 = vadd.f32 %v112, %v369
    %v371 = vpop.f32.mrf.mxu0
    %v372 = vadd.f32 %v108, %v371
    %v373 = vpop.f32.mrf.mxu0
    %v374 = vadd.f32 %v112, %v373
    %375 = vmatprep.mubr.bf16.mxu0 0
    %376 = vmatmul.mubr.bf16.gmra.mxu0 %v158
    %v377 = vpop.f32.mrf.mxu0
    %v378 = vadd.f32 %v108, %v377
    %v379 = vpop.f32.mrf.mxu0
    %v380 = vadd.f32 %v112, %v379
    %v381 = vpop.f32.mrf.mxu0
    %v382 = vadd.f32 %v108, %v381
    %v383 = vpop.f32.mrf.mxu0
    %v384 = vadd.f32 %v112, %v383
    %385 = vmatprep.mubr.bf16.mxu0 0
    %386 = vmatmul.mubr.bf16.gmra.mxu0 %v159
    %v387 = vpop.f32.mrf.mxu0
    %v388 = vadd.f32 %v108, %v387
    %v389 = vpop.f32.mrf.mxu0
    %v390 = vadd.f32 %v112, %v389
    %v391 = vpop.f32.mrf.mxu0
    %v392 = vadd.f32 %v108, %v391
    %v393 = vpop.f32.mrf.mxu0
    %v394 = vadd.f32 %v112, %v393
    %395 = vmatprep.mubr.bf16.mxu0 0
    %396 = vmatmul.mubr.bf16.gmra.mxu0 %v160
    %v397 = vpop.f32.mrf.mxu0
    %v398 = vadd.f32 %v108, %v397
    %v399 = vpop.f32.mrf.mxu0
    %v400 = vadd.f32 %v112, %v399
    %v401 = vpop.f32.mrf.mxu0
    %v402 = vadd.f32 %v108, %v401
    %v403 = vpop.f32.mrf.mxu0
    %v404 = vadd.f32 %v112, %v403
    %405 = vmatprep.mubr.bf16.mxu0 0
    %406 = vmatmul.mubr.bf16.gmra.mxu0 %v161
    %v407 = vpop.f32.mrf.mxu0
    %v408 = vadd.f32 %v108, %v407
    %v409 = vpop.f32.mrf.mxu0
    %v410 = vadd.f32 %v112, %v409
    %v411 = vpop.f32.mrf.mxu0
    %v412 = vadd.f32 %v108, %v411
    %v413 = vpop.f32.mrf.mxu0
    %v414 = vadd.f32 %v112, %v413
    %415 = vmatprep.mubr.bf16.mxu0 0
    %416 = vmatmul.mubr.bf16.gmra.mxu0 %v162
    %v417 = vpop.f32.mrf.mxu0
    %v418 = vadd.f32 %v108, %v417
    %v419 = vpop.f32.mrf.mxu0
    %v420 = vadd.f32 %v112, %v419
    %v421 = vpop.f32.mrf.mxu0
    %v422 = vadd.f32 %v108, %v421
    %v423 = vpop.f32.mrf.mxu0
    %v424 = vadd.f32 %v112, %v423
    %425 = vmatprep.mubr.bf16.mxu0 0
    %426 = vmatmul.mubr.bf16.gmra.mxu0 %v163
    %v427 = vpop.f32.mrf.mxu0
    %v428 = vadd.f32 %v108, %v427
    %v429 = vpop.f32.mrf.mxu0
    %v430 = vadd.f32 %v112, %v429
    %v431 = vpop.f32.mrf.mxu0
    %v432 = vadd.f32 %v108, %v431
    %v433 = vpop.f32.mrf.mxu0
    %v434 = vadd.f32 %v112, %v433
    %435 = vmatprep.mubr.bf16.mxu0 0
    %436 = vmatmul.mubr.bf16.gmra.mxu0 %v164
    %v437 = vpop.f32.mrf.mxu0
    %v438 = vadd.f32 %v108, %v437
    %v439 = vpop.f32.mrf.mxu0
    %v440 = vadd.f32 %v112, %v439
    %v441 = vpop.f32.mrf.mxu0
    %v442 = vadd.f32 %v108, %v441
    %v443 = vpop.f32.mrf.mxu0
    %v444 = vadd.f32 %v112, %v443
    %445 = vdwg.mxu0
    %446 = vmatprep.subr.bf16.mxu0 %v300
    %447 = vmatpush1.bf16.msra.mxu0 %v299
    %448 = vmatprep.subr.bf16.mxu0 %v296
    %449 = vmatpush1.bf16.msra.mxu0 %v295
    %450 = vmatprep.subr.bf16.mxu0 %v292
    %451 = vmatpush1.bf16.msra.mxu0 %v291
    %452 = vmatprep.subr.bf16.mxu0 %v288
    %453 = vmatpush1.bf16.msra.mxu0 %v287
    %454 = vmatprep.subr.bf16.mxu0 %v284
    %455 = vmatpush1.bf16.msra.mxu0 %v283
    %456 = vmatprep.subr.bf16.mxu0 %v280
    %457 = vmatpush1.bf16.msra.mxu0 %v279
    %458 = vmatprep.subr.bf16.mxu0 %v276
    %459 = vmatpush1.bf16.msra.mxu0 %v275
    %460 = vmatprep.subr.bf16.mxu0 %v272
    %461 = vmatpush1.bf16.msra.mxu0 %v271
    %462 = vmatprep.subr.bf16.mxu0 0
    %463 = vmatpush2.bf16.msra.mxu0 0
    %464 = vmatprep.subr.bf16.mxu0 0
    %465 = vmatpush2.bf16.msra.mxu0 0
    %466 = vmatprep.subr.bf16.mxu0 0
    %467 = vmatpush2.bf16.msra.mxu0 0
    %468 = vmatprep.subr.bf16.mxu0 0
    %469 = vmatpush2.bf16.msra.mxu0 0
    %470 = vmatprep.subr.bf16.mxu0 0
    %471 = vmatpush2.bf16.msra.mxu0 0
    %472 = vmatprep.subr.bf16.mxu0 0
    %473 = vmatpush2.bf16.msra.mxu0 0
    %474 = vmatprep.subr.bf16.mxu0 0
    %475 = vmatpush2.bf16.msra.mxu0 0
    %476 = vmatprep.subr.bf16.mxu0 0
    %477 = vmatpush2.bf16.msra.mxu0 0
    %478 = vmatprep.mubr.bf16.mxu0 0
    %479 = vmatmul.mubr.bf16.gmra.mxu0 %v157
    %v480 = vpop.f32.mrf.mxu0
    %v481 = vadd.f32 %v116, %v480
    %v482 = vpop.f32.mrf.mxu0
    %v483 = vadd.f32 %v120, %v482
    %v484 = vpop.f32.mrf.mxu0
    %v485 = vadd.f32 %v116, %v484
    %v486 = vpop.f32.mrf.mxu0
    %v487 = vadd.f32 %v120, %v486
    %488 = vmatprep.mubr.bf16.mxu0 0
    %489 = vmatmul.mubr.bf16.gmra.mxu0 %v158
    %v490 = vpop.f32.mrf.mxu0
    %v491 = vadd.f32 %v116, %v490
    %v492 = vpop.f32.mrf.mxu0
    %v493 = vadd.f32 %v120, %v492
    %v494 = vpop.f32.mrf.mxu0
    %v495 = vadd.f32 %v116, %v494
    %v496 = vpop.f32.mrf.mxu0
    %v497 = vadd.f32 %v120, %v496
    %498 = vmatprep.mubr.bf16.mxu0 0
    %499 = vmatmul.mubr.bf16.gmra.mxu0 %v159
    %v500 = vpop.f32.mrf.mxu0
    %v501 = vadd.f32 %v116, %v500
    %v502 = vpop.f32.mrf.mxu0
    %v503 = vadd.f32 %v120, %v502
    %v504 = vpop.f32.mrf.mxu0
    %v505 = vadd.f32 %v116, %v504
    %v506 = vpop.f32.mrf.mxu0
    %v507 = vadd.f32 %v120, %v506
    %508 = vmatprep.mubr.bf16.mxu0 0
    %509 = vmatmul.mubr.bf16.gmra.mxu0 %v160
    %v510 = vpop.f32.mrf.mxu0
    %v511 = vadd.f32 %v116, %v510
    %v512 = vpop.f32.mrf.mxu0
    %v513 = vadd.f32 %v120, %v512
    %v514 = vpop.f32.mrf.mxu0
    %v515 = vadd.f32 %v116, %v514
    %v516 = vpop.f32.mrf.mxu0
    %v517 = vadd.f32 %v120, %v516
    %518 = vmatprep.mubr.bf16.mxu0 0
    %519 = vmatmul.mubr.bf16.gmra.mxu0 %v161
    %v520 = vpop.f32.mrf.mxu0
    %v521 = vadd.f32 %v116, %v520
    %v522 = vpop.f32.mrf.mxu0
    %v523 = vadd.f32 %v120, %v522
    %v524 = vpop.f32.mrf.mxu0
    %v525 = vadd.f32 %v116, %v524
    %v526 = vpop.f32.mrf.mxu0
    %v527 = vadd.f32 %v120, %v526
    %528 = vmatprep.mubr.bf16.mxu0 0
    %529 = vmatmul.mubr.bf16.gmra.mxu0 %v162
    %v530 = vpop.f32.mrf.mxu0
    %v531 = vadd.f32 %v116, %v530
    %v532 = vpop.f32.mrf.mxu0
    %v533 = vadd.f32 %v120, %v532
    %v534 = vpop.f32.mrf.mxu0
    %v535 = vadd.f32 %v116, %v534
    %v536 = vpop.f32.mrf.mxu0
    %v537 = vadd.f32 %v120, %v536
    %538 = vmatprep.mubr.bf16.mxu0 0
    %539 = vmatmul.mubr.bf16.gmra.mxu0 %v163
    %v540 = vpop.f32.mrf.mxu0
    %v541 = vadd.f32 %v116, %v540
    %v542 = vpop.f32.mrf.mxu0
    %v543 = vadd.f32 %v120, %v542
    %v544 = vpop.f32.mrf.mxu0
    %v545 = vadd.f32 %v116, %v544
    %v546 = vpop.f32.mrf.mxu0
    %v547 = vadd.f32 %v120, %v546
    %548 = vmatprep.mubr.bf16.mxu0 0
    %549 = vmatmul.mubr.bf16.gmra.mxu0 %v164
    %v550 = vpop.f32.mrf.mxu0
    %v551 = vadd.f32 %v116, %v550
    %v552 = vpop.f32.mrf.mxu0
    %v553 = vadd.f32 %v120, %v552
    %v554 = vpop.f32.mrf.mxu0
    %v555 = vadd.f32 %v116, %v554
    %v556 = vpop.f32.mrf.mxu0
    %v557 = vadd.f32 %v120, %v556
    %558 = vdwg.mxu0
    %v559 = vpack.c.bf16 %v372, %v368
    %v560 = vpack.c.bf16 %v374, %v370
    %v561 = vpack.c.bf16 %v485, %v481
    %v562 = vpack.c.bf16 %v487, %v483
    %v563 = vpack.c.bf16 %v382, %v378
    %v564 = vpack.c.bf16 %v384, %v380
    %v565 = vpack.c.bf16 %v495, %v491
    %v566 = vpack.c.bf16 %v497, %v493
    %v567 = vpack.c.bf16 %v392, %v388
    %v568 = vpack.c.bf16 %v394, %v390
    %v569 = vpack.c.bf16 %v505, %v501
    %v570 = vpack.c.bf16 %v507, %v503
    %v571 = vpack.c.bf16 %v402, %v398
    %v572 = vpack.c.bf16 %v404, %v400
    %v573 = vpack.c.bf16 %v515, %v511
    %v574 = vpack.c.bf16 %v517, %v513
    %v575 = vpack.c.bf16 %v412, %v408
    %v576 = vpack.c.bf16 %v414, %v410
    %v577 = vpack.c.bf16 %v525, %v521
    %v578 = vpack.c.bf16 %v527, %v523
    %v579 = vpack.c.bf16 %v422, %v418
    %v580 = vpack.c.bf16 %v424, %v420
    %v581 = vpack.c.bf16 %v535, %v531
    %v582 = vpack.c.bf16 %v537, %v533
    %v583 = vpack.c.bf16 %v432, %v428
    %v584 = vpack.c.bf16 %v434, %v430
    %v585 = vpack.c.bf16 %v545, %v541
    %v586 = vpack.c.bf16 %v547, %v543
    %v587 = vpack.c.bf16 %v442, %v438
    %v588 = vpack.c.bf16 %v444, %v440
    %v589 = vpack.c.bf16 %v555, %v551
    %v590 = vpack.c.bf16 %v557, %v553
    %v623 = vunpack.c.l.b16 %v559
    %v624 = vunpack.c.l.b16 %v560
    %v625 = vunpack.c.l.b16 %v561
    %v626 = vunpack.c.l.b16 %v562
    %v627 = vunpack.c.h.b16 %v559
    %v628 = vunpack.c.h.b16 %v560
    %v629 = vunpack.c.h.b16 %v561
    %v630 = vunpack.c.h.b16 %v562
    %v631 = vunpack.c.l.b16 %v563
    %v632 = vunpack.c.l.b16 %v564
    %v633 = vunpack.c.l.b16 %v565
    %v634 = vunpack.c.l.b16 %v566
    %v635 = vunpack.c.h.b16 %v563
    %v636 = vunpack.c.h.b16 %v564
    %v637 = vunpack.c.h.b16 %v565
    %v638 = vunpack.c.h.b16 %v566
    %v639 = vunpack.c.l.b16 %v567
    %v640 = vunpack.c.l.b16 %v568
    %v641 = vunpack.c.l.b16 %v569
    %v642 = vunpack.c.l.b16 %v570
    %v643 = vunpack.c.h.b16 %v567
    %v644 = vunpack.c.h.b16 %v568
    %v645 = vunpack.c.h.b16 %v569
    %v646 = vunpack.c.h.b16 %v570
    %v647 = vunpack.c.l.b16 %v571
    %v648 = vunpack.c.l.b16 %v572
    %v649 = vunpack.c.l.b16 %v573
    %v650 = vunpack.c.l.b16 %v574
    %v651 = vunpack.c.h.b16 %v571
    %v652 = vunpack.c.h.b16 %v572
    %v653 = vunpack.c.h.b16 %v573
    %v654 = vunpack.c.h.b16 %v574
    %v655 = vunpack.c.l.b16 %v575
    %v656 = vunpack.c.l.b16 %v576
    %v657 = vunpack.c.l.b16 %v577
    %v658 = vunpack.c.l.b16 %v578
    %v659 = vunpack.c.h.b16 %v575
    %v660 = vunpack.c.h.b16 %v576
    %v661 = vunpack.c.h.b16 %v577
    %v662 = vunpack.c.h.b16 %v578
    %v663 = vunpack.c.l.b16 %v579
    %v664 = vunpack.c.l.b16 %v580
    %v665 = vunpack.c.l.b16 %v581
    %v666 = vunpack.c.l.b16 %v582
    %v667 = vunpack.c.h.b16 %v579
    %v668 = vunpack.c.h.b16 %v580
    %v669 = vunpack.c.h.b16 %v581
    %v670 = vunpack.c.h.b16 %v582
    %v671 = vunpack.c.l.b16 %v583
    %v672 = vunpack.c.l.b16 %v584
    %v673 = vunpack.c.l.b16 %v585
    %v674 = vunpack.c.l.b16 %v586
    %v675 = vunpack.c.h.b16 %v583
    %v676 = vunpack.c.h.b16 %v584
    %v677 = vunpack.c.h.b16 %v585
    %v678 = vunpack.c.h.b16 %v586
    %v679 = vunpack.c.l.b16 %v587
    %v680 = vunpack.c.l.b16 %v588
    %v681 = vunpack.c.l.b16 %v589
    %v682 = vunpack.c.l.b16 %v590
    %v683 = vunpack.c.h.b16 %v587
    %v684 = vunpack.c.h.b16 %v588
    %v685 = vunpack.c.h.b16 %v589
    %v686 = vunpack.c.h.b16 %v590
    %v687 = vpack.c.b16 %v624, %v623
    %v688 = vpack.c.b16 %v626, %v625
    %v689 = vpack.c.b16 %v628, %v627
    %v690 = vpack.c.b16 %v630, %v629
    %v691 = vpack.c.b16 %v632, %v631
    %v692 = vpack.c.b16 %v634, %v633
    %v693 = vpack.c.b16 %v636, %v635
    %v694 = vpack.c.b16 %v638, %v637
    %v695 = vpack.c.b16 %v640, %v639
    %v696 = vpack.c.b16 %v642, %v641
    %v697 = vpack.c.b16 %v644, %v643
    %v698 = vpack.c.b16 %v646, %v645
    %v699 = vpack.c.b16 %v648, %v647
    %v700 = vpack.c.b16 %v650, %v649
    %v701 = vpack.c.b16 %v652, %v651
    %v702 = vpack.c.b16 %v654, %v653
    %v703 = vpack.c.b16 %v656, %v655
    %v704 = vpack.c.b16 %v658, %v657
    %v705 = vpack.c.b16 %v660, %v659
    %v706 = vpack.c.b16 %v662, %v661
    %v707 = vpack.c.b16 %v664, %v663
    %v708 = vpack.c.b16 %v666, %v665
    %v709 = vpack.c.b16 %v668, %v667
    %v710 = vpack.c.b16 %v670, %v669
    %v711 = vpack.c.b16 %v672, %v671
    %v712 = vpack.c.b16 %v674, %v673
    %v713 = vpack.c.b16 %v676, %v675
    %v714 = vpack.c.b16 %v678, %v677
    %v715 = vpack.c.b16 %v680, %v679
    %v716 = vpack.c.b16 %v682, %v681
    %v717 = vpack.c.b16 %v684, %v683
    %v718 = vpack.c.b16 %v686, %v685
    %751 = vst [vmem:[#allocation8] sm:$0xff] %v687
    %752 = vst [vmem:[#allocation8 + $0x8] sm:$0xff] %v688
    %753 = vst [vmem:[#allocation8 + $0x10] sm:$0xff] %v689
    %754 = vst [vmem:[#allocation8 + $0x18] sm:$0xff] %v690
    %755 = vst [vmem:[#allocation8 + $0x20] sm:$0xff] %v691
    %756 = vst [vmem:[#allocation8 + $0x28] sm:$0xff] %v692
    %757 = vst [vmem:[#allocation8 + $0x30] sm:$0xff] %v693
    %758 = vst [vmem:[#allocation8 + $0x38] sm:$0xff] %v694
    %759 = vst [vmem:[#allocation8 + $0x40] sm:$0xff] %v695
    %760 = vst [vmem:[#allocation8 + $0x48] sm:$0xff] %v696
    %761 = vst [vmem:[#allocation8 + $0x50] sm:$0xff] %v697
    %762 = vst [vmem:[#allocation8 + $0x58] sm:$0xff] %v698
    %763 = vst [vmem:[#allocation8 + $0x60] sm:$0xff] %v699
    %764 = vst [vmem:[#allocation8 + $0x68] sm:$0xff] %v700
    %765 = vst [vmem:[#allocation8 + $0x70] sm:$0xff] %v701
    %766 = vst [vmem:[#allocation8 + $0x78] sm:$0xff] %v702
    %767 = vst [vmem:[#allocation8 + $0x80] sm:$0xff] %v703
    %768 = vst [vmem:[#allocation8 + $0x88] sm:$0xff] %v704
    %769 = vst [vmem:[#allocation8 + $0x90] sm:$0xff] %v705
    %770 = vst [vmem:[#allocation8 + $0x98] sm:$0xff] %v706
    %771 = vst [vmem:[#allocation8 + $0xa0] sm:$0xff] %v707
    %772 = vst [vmem:[#allocation8 + $0xa8] sm:$0xff] %v708
    %773 = vst [vmem:[#allocation8 + $0xb0] sm:$0xff] %v709
    %774 = vst [vmem:[#allocation8 + $0xb8] sm:$0xff] %v710
    %775 = vst [vmem:[#allocation8 + $0xc0] sm:$0xff] %v711
    %776 = vst [vmem:[#allocation8 + $0xc8] sm:$0xff] %v712
    %777 = vst [vmem:[#allocation8 + $0xd0] sm:$0xff] %v713
    %778 = vst [vmem:[#allocation8 + $0xd8] sm:$0xff] %v714
    %779 = vst [vmem:[#allocation8 + $0xe0] sm:$0xff] %v715
    %780 = vst [vmem:[#allocation8 + $0xe8] sm:$0xff] %v716
    %781 = vst [vmem:[#allocation8 + $0xf0] sm:$0xff] %v717
    %782 = vst [vmem:[#allocation8 + $0xf8] sm:$0xff] %v718
    // Predicated region
    $region26: #{tpu_custom_call.1} parent=1 // pred_check
      _
    $region27: #{tpu_custom_call.1} parent=1 // pred_check_branch
      %784 = sbr.rel (0) target = $region29
    $region28: #{tpu_custom_call.1} parent=1 // pred_region
      %s786 = ssub.s32 4096, 4096
      %787 = vsyncadd [#allocation4], %s786
      %s788 = sshll.u32 [#allocation8], 4
      %s789 = int_to_ptr.vmem [resolvable:$true] %s788
      %794 = dma.vmem_to_hbm [thread:$0]  %s789, 4096, %s3, [#allocation4], 256, 256, 16
    $region29: #{tpu_custom_call.1} parent=1 // pred_fallthru
      _
    // Predicated region
    $region30: #{tpu_custom_call.1} parent=1 // pred_check
      _
    $region31: #{tpu_custom_call.1} parent=1 // pred_check_branch
      %796 = sbr.rel (0) target = $region33
    $region32: #{tpu_custom_call.1} parent=1 // pred_region
      %797 = dma.done [#allocation4], 4096
    $region33: #{tpu_custom_call.1} parent=1 // pred_fallthru
      _
    %798 = vsyncpa [#allocation3], 1
    %799 = vsyncpa [#allocation6], 1
    %800 = vsyncpa [#allocation4], 1

</llo_original>
